<compile_context>
chip_gen: v5e
topology: v5e:2x2
jax: 0.10.0
libtpu: 0.0.40
codegen_flags: <defaults>
</compile_context>

<pallas_src>
import functools

import jax
import jax.numpy as jnp
from jax.experimental import pallas as pl
from jax.experimental.pallas import tpu as pltpu


def _round_up(x, m):
    return ((x + m - 1) // m) * m


def _vmem_capacity_bytes():
    """Generation-aware VMEM capacity (v5e/v6e: 128 MiB, v7x: 64 MiB per TC)."""
    try:
        cap = int(pltpu.get_tpu_info().vmem_capacity_bytes)
        if cap > 0:
            return cap
    except Exception:
        pass
    return 64 * 1024 * 1024  # conservative (v7x-sized) default


def _row_partial_loss(x, c):
    """-(c * log_softmax(x)).sum(axis=1), algebraically folded.

    per_row = (max + logsumexp) * sum(c) - sum(c * x);  x, c: (bn, C) f32 -> (bn, 1).
    """
    m = jnp.max(x, axis=1, keepdims=True)
    lse = jnp.log(jnp.sum(jnp.exp(x - m), axis=1, keepdims=True))
    sum_c = jnp.sum(c, axis=1, keepdims=True)
    sum_cx = jnp.sum(c * x, axis=1, keepdims=True)
    return (m + lse) * sum_c - sum_cx


def _mask_rows(per_row, block_i, block_n, total_n):
    # Zero rows past the true N (ragged last block: Pallas feeds unspecified data there).
    row = jax.lax.broadcasted_iota(jnp.int32, (block_n, 1), 0) + block_i * block_n
    return jnp.where(row < total_n, per_row, jnp.float32(0.0))


def _fused_kernel(idx_ref, out_ref, conf_ref, row_loss_ref, *,
                  total_n, block_n, selector_bf16):
    """Gather confidence rows in-kernel from a small VMEM-resident table (one-hot matmul)."""
    i = pl.program_id(0)
    x = out_ref[...].astype(jnp.float32)                      # (bn, C)
    table = conf_ref[...]                                     # (M, C), resident
    idx = idx_ref[...]                                        # (bn, 1) int32

    m_rows = table.shape[0]
    cols = jax.lax.broadcasted_iota(jnp.int32, (block_n, m_rows), 1)
    sel_dtype = jnp.bfloat16 if selector_bf16 else jnp.float32
    onehot = (cols == idx).astype(sel_dtype)                  # exact 0/1 selector
    c = jnp.dot(onehot, table.astype(sel_dtype),
                preferred_element_type=jnp.float32)           # (bn, C) gathered rows

    per_row = _row_partial_loss(x, c)
    row_loss_ref[...] = _mask_rows(per_row, i, block_n, total_n)


def _pregather_kernel(out_ref, conf_ref, row_loss_ref, *, total_n, block_n):
    """Fallback: confidence rows already gathered outside the kernel."""
    i = pl.program_id(0)
    x = out_ref[...].astype(jnp.float32)                      # (bn, C)
    c = conf_ref[...].astype(jnp.float32)                     # (bn, C)
    per_row = _row_partial_loss(x, c)
    row_loss_ref[...] = _mask_rows(per_row, i, block_n, total_n)


def _pick_block_n(n, c, m_rows, out_bytes, conf_bytes, fuse, *,
                  cap_rows, budget_bytes, align):
    """Largest aligned row tile whose estimated VMEM footprint fits the budget."""
    # Per-row VMEM bytes: double-buffered streamed inputs + f32 working copies
    # + (fused) one-hot selector and gathered rows + per-row loss output.
    per_row = 2 * c * out_bytes                     # logits stream (2x buffered)
    if out_bytes != 4:
        per_row += 4 * c                            # f32 cast working copy
    if fuse:
        per_row += 2 * 4                            # index column (2x buffered)
        per_row += 4 * m_rows                       # one-hot selector (f32 worst case)
        per_row += 4 * c                            # gathered confidence rows
        fixed = 2 * m_rows * c * conf_bytes         # resident table (default 2x buffered)
    else:
        per_row += 2 * c * conf_bytes               # gathered confidence stream
        if conf_bytes != 4:
            per_row += 4 * c
        fixed = 0
    per_row += 2 * 4                                # per-row loss output (tiny)

    avail = max(budget_bytes - fixed, per_row * align)
    bn = avail // per_row
    bn = max(align, min(cap_rows, (bn // align) * align))
    # Keep >= ~4 grid steps when N allows it (pipelining + v7x dual-core split).
    bn = min(bn, max(align, _round_up(-(-n // 4), align)))
    return int(bn)


def partial_loss2_forward(outputs, confidence, index, *, block_n=None,
                          fuse_gather_max_rows=256,
                          fuse_gather_table_bytes=1 * 1024 * 1024,
                          selector_bf16=False):
    """outputs: (N, C), confidence: (M, C), index: (N,) int -> scalar f32 loss."""
    n, c = outputs.shape
    m_rows = confidence.shape[0]
    out_bytes = jnp.dtype(outputs.dtype).itemsize
    conf_bytes = jnp.dtype(confidence.dtype).itemsize

    # Generation-aware VMEM budgeting.
    vmem_cap = _vmem_capacity_bytes()
    vmem_limit = min(int(vmem_cap * 0.7), 96 * 1024 * 1024)   # v7x ~44 MiB, v5e/v6e ~90 MiB
    budget = int(vmem_limit * 0.75)                            # headroom for compiler scratch

    table_bytes = m_rows * c * conf_bytes
    fuse = (m_rows <= fuse_gather_max_rows) and (table_bytes <= fuse_gather_table_bytes)

    # Sublane alignment by input dtype (f32: 8, bf16: 16, int8/fp8: 32).
    align = max(8, 32 // out_bytes)
    cap_rows = 2048 if vmem_cap <= 64 * 1024 * 1024 else 4096

    if block_n is None:
        block_n = _pick_block_n(n, c, m_rows, out_bytes, conf_bytes, fuse,
                                cap_rows=cap_rows, budget_bytes=budget, align=align)
    assert block_n % 8 == 0 and block_n >= 8

    # No host-side padding: ragged last block is masked in-kernel and its
    # out-of-bounds output rows are discarded by the pipeline.
    grid = (pl.cdiv(n, block_n),)

    compiler_params = pltpu.CompilerParams(
        dimension_semantics=("parallel",),          # independent row blocks
        vmem_limit_bytes=vmem_limit,
    )
    out_shape = jax.ShapeDtypeStruct((n, 1), jnp.float32)
    out_spec = pl.BlockSpec((block_n, 1), lambda i: (i, 0))

    if fuse:
        idx2d = index.astype(jnp.int32).reshape(n, 1)
        kernel = functools.partial(_fused_kernel, total_n=n, block_n=block_n,
                                   selector_bf16=selector_bf16)
        row_losses = pl.pallas_call(
            kernel,
            out_shape=out_shape,
            grid_spec=pltpu.PrefetchScalarGridSpec(
                num_scalar_prefetch=0,
                grid=grid,
                in_specs=[
                    pl.BlockSpec((block_n, 1), lambda i: (i, 0)),   # index rows
                    pl.BlockSpec((block_n, c), lambda i: (i, 0)),   # logits rows
                    # Constant index_map -> the small (<=1 MiB) table is DMA'd once;
                    # its (default 2x-buffered) footprint is accounted for in the
                    # VMEM budget above.
                    pl.BlockSpec((m_rows, c), lambda i: (0, 0)),
                ],
                out_specs=out_spec,
            ),
            compiler_params=compiler_params,
        )(idx2d, outputs, confidence)
    else:
        # TODO(synk): for very large confidence tables, replace this XLA gather with an
        # in-kernel DMA row gather (confidence kept in HBM via memory_space=pl.ANY,
        # scalar-prefetched index, per-row make_async_copy into a double-buffered
        # VMEM scratch) to avoid the (N, C) HBM round trip.
        conf_sel = jnp.take(confidence, index, axis=0)              # (N, C)
        kernel = functools.partial(_pregather_kernel, total_n=n, block_n=block_n)
        row_losses = pl.pallas_call(
            kernel,
            out_shape=out_shape,
            grid_spec=pltpu.PrefetchScalarGridSpec(
                num_scalar_prefetch=0,
                grid=grid,
                in_specs=[
                    pl.BlockSpec((block_n, c), lambda i: (i, 0)),
                    pl.BlockSpec((block_n, c), lambda i: (i, 0)),
                ],
                out_specs=out_spec,
            ),
            compiler_params=compiler_params,
        )(outputs, conf_sel)

    # Rows past N never reach HBM (discarded / masked); mean over the true N.
    return jnp.sum(row_losses) / jnp.float32(n)


def _reference(outputs, confidence, index):
    logsm = jax.nn.log_softmax(outputs.astype(jnp.float32), axis=1)
    final = logsm * confidence[index].astype(jnp.float32)
    return -jnp.mean(jnp.sum(final, axis=1))


if __name__ == "__main__":
    key = jax.random.PRNGKey(0)
    k1, k2, k3 = jax.random.split(key, 3)

    num_samples = 32   # rows of the confidence table (M)
    batch_n = 16       # batch size (N)
    num_classes = 32   # C

    outputs = jax.random.normal(k1, (batch_n, num_classes), dtype=jnp.float32)
    conf_raw = jax.random.uniform(k2, (num_samples, num_classes), dtype=jnp.float32)
    confidence = conf_raw / jnp.sum(conf_raw, axis=1, keepdims=True)
    index = jax.random.randint(k3, (batch_n,), 0, num_samples, dtype=jnp.int32)

    ref = _reference(outputs, confidence, index)

    # 1) fused in-kernel gather path (small table, resident in VMEM)
    loss = jax.block_until_ready(partial_loss2_forward(outputs, confidence, index))
    assert jnp.allclose(loss, ref, rtol=1e-5, atol=1e-5), (loss, ref)

    # 2) fallback pre-gather path (force it via tiny fuse threshold)
    loss_fb = jax.block_until_ready(
        partial_loss2_forward(outputs, confidence, index, fuse_gather_max_rows=1))
    assert jnp.allclose(loss_fb, ref, rtol=1e-5, atol=1e-5), (loss_fb, ref)

    # 3) N not a multiple of the row tile -> exercises ragged last block + in-kernel mask
    loss_pad = jax.block_until_ready(
        partial_loss2_forward(outputs[:13], confidence, index[:13]))
    ref_pad = _reference(outputs[:13], confidence, index[:13])
    assert jnp.allclose(loss_pad, ref_pad, rtol=1e-5, atol=1e-5), (loss_pad, ref_pad)

    # 4) bf16 selector matmul (table rounded to bf16 -> looser tolerance)
    loss_bf16 = jax.block_until_ready(
        partial_loss2_forward(outputs, confidence, index, selector_bf16=True))
    assert jnp.allclose(loss_bf16, ref, rtol=1e-2, atol=1e-2), (loss_bf16, ref)

    print("KERNEL_OK")
</pallas_src>

<mosaic_0001>
module attributes {stable_mosaic.version = 11 : i64} {
  func.func @_fused_kernel(%arg0: i32, %arg1: memref<8x1xi32, #tpu.memory_space<vmem>>, %arg2: memref<8x32xf32, #tpu.memory_space<vmem>>, %arg3: memref<32x32xf32, #tpu.memory_space<vmem>>, %arg4: memref<8x1xf32, #tpu.memory_space<vmem>>) attributes {dimension_semantics = [#tpu.dimension_semantics<parallel>], iteration_bounds = array<i64: 2>, scalar_prefetch = 0 : i64, scratch_operands = 0 : i64, tpu.core_type = #tpu.core_type<tc>, window_params = [{transform_indices = @transform_0, window_bounds = array<i64: 8, 1>}, {transform_indices = @transform_1, window_bounds = array<i64: 8, 32>}, {pipeline_mode = #tpu.pipeline_mode<synchronous>, transform_indices = @transform_2, window_bounds = array<i64: 32, 32>}, {transform_indices = @transform_3, window_bounds = array<i64: 8, 1>}]} {
    %c0 = arith.constant 0 : index
    %c0_0 = arith.constant 0 : index
    %0 = vector.load %arg2[%c0, %c0_0] : memref<8x32xf32, #tpu.memory_space<vmem>>, vector<8x32xf32>
    %c0_1 = arith.constant 0 : index
    %c0_2 = arith.constant 0 : index
    %1 = vector.load %arg3[%c0_1, %c0_2] : memref<32x32xf32, #tpu.memory_space<vmem>>, vector<32x32xf32>
    %c0_3 = arith.constant 0 : index
    %c0_4 = arith.constant 0 : index
    %2 = vector.load %arg1[%c0_3, %c0_4] : memref<8x1xi32, #tpu.memory_space<vmem>>, vector<8x1xi32>
    %3 = tpu.iota {dimensions = array<i32: 1>} : vector<8x32xi32>
    %4 = vector.broadcast %2 : vector<8x1xi32> to vector<8x32xi32>
    %5 = arith.cmpi eq, %3, %4 : vector<8x32xi32>
    %6 = arith.extui %5 : vector<8x32xi1> to vector<8x32xi32>
    %7 = arith.sitofp %6 : vector<8x32xi32> to vector<8x32xf32>
    %cst = arith.constant dense<0.000000e+00> : vector<8x32xf32>
    %8 = tpu.matmul %7, %1, %cst {dimension_numbers = #tpu.dot_dimension_numbers<[1], [0], [0], [1], [0, 0, 1, 1], [], []>} : vector<8x32xf32>, vector<32x32xf32>, vector<8x32xf32> -> vector<8x32xf32>
    %cst_5 = arith.constant dense<0xFF800000> : vector<8xf32>
    %9 = vector.multi_reduction <maximumf>, %0, %cst_5 [1] : vector<8x32xf32> to vector<8xf32>
    %10 = vector.shape_cast %9 : vector<8xf32> to vector<8x1xf32>
    %11 = vector.broadcast %10 : vector<8x1xf32> to vector<8x32xf32>
    %12 = arith.subf %0, %11 : vector<8x32xf32>
    %13 = math.exp %12 : vector<8x32xf32>
    %cst_6 = arith.constant dense<0.000000e+00> : vector<8xf32>
    %14 = vector.multi_reduction <add>, %13, %cst_6 [1] : vector<8x32xf32> to vector<8xf32>
    %15 = vector.shape_cast %14 : vector<8xf32> to vector<8x1xf32>
    %16 = math.log %15 : vector<8x1xf32>
    %cst_7 = arith.constant dense<0.000000e+00> : vector<8xf32>
    %17 = vector.multi_reduction <add>, %8, %cst_7 [1] : vector<8x32xf32> to vector<8xf32>
    %18 = vector.shape_cast %17 : vector<8xf32> to vector<8x1xf32>
    %19 = arith.mulf %8, %0 : vector<8x32xf32>
    %cst_8 = arith.constant dense<0.000000e+00> : vector<8xf32>
    %20 = vector.multi_reduction <add>, %19, %cst_8 [1] : vector<8x32xf32> to vector<8xf32>
    %21 = vector.shape_cast %20 : vector<8xf32> to vector<8x1xf32>
    %22 = arith.addf %10, %16 : vector<8x1xf32>
    %23 = arith.mulf %22, %18 : vector<8x1xf32>
    %24 = arith.subf %23, %21 : vector<8x1xf32>
    %25 = tpu.iota {dimensions = array<i32: 0>} : vector<8x1xi32>
    %c8_i32 = arith.constant 8 : i32
    %26 = arith.muli %arg0, %c8_i32 : i32
    %27 = vector.broadcast %26 : i32 to vector<8x1xi32>
    %28 = arith.addi %25, %27 : vector<8x1xi32>
    %c16_i32 = arith.constant 16 : i32
    %29 = vector.broadcast %c16_i32 : i32 to vector<8x1xi32>
    %30 = arith.cmpi slt, %28, %29 : vector<8x1xi32>
    %cst_9 = arith.constant 0.000000e+00 : f32
    %31 = vector.broadcast %cst_9 : f32 to vector<8x1xf32>
    %32 = arith.select %30, %24, %31 : vector<8x1xi1>, vector<8x1xf32>
    %c0_10 = arith.constant 0 : index
    %c0_11 = arith.constant 0 : index
    %33 = vector.load %arg4[%c0_10, %c0_11] : memref<8x1xf32, #tpu.memory_space<vmem>>, vector<8x1xf32>
    tpu.vector_store %arg4[%c0_10, %c0_11], %32 {strides = array<i32>} : memref<8x1xf32, #tpu.memory_space<vmem>>, vector<8x1xf32>,
    return
  }
  func.func @transform_0(%arg0: i32) -> (i32, i32) {
    %c0_i32 = arith.constant 0 : i32
    %c0_i32_0 = arith.constant 0 : i32
    return %arg0, %c0_i32 : i32, i32
  }
  func.func @transform_1(%arg0: i32) -> (i32, i32) {
    %c0_i32 = arith.constant 0 : i32
    %c0_i32_0 = arith.constant 0 : i32
    return %arg0, %c0_i32 : i32, i32
  }
  func.func @transform_2(%arg0: i32) -> (i32, i32) {
    %c0_i32 = arith.constant 0 : i32
    %c0_i32_0 = arith.constant 0 : i32
    %c0_i32_1 = arith.constant 0 : i32
    return %c0_i32, %c0_i32_0 : i32, i32
  }
  func.func @transform_3(%arg0: i32) -> (i32, i32) {
    %c0_i32 = arith.constant 0 : i32
    %c0_i32_0 = arith.constant 0 : i32
    return %arg0, %c0_i32 : i32, i32
  }
}

</mosaic_0001>

<llo_original>
// kernel: tpu_custom_call.1
$region0: #{tpu_custom_call.1}
  #allocation0 [shape = 'u32[]', space=smem, size = 0x4, offset = 0x4, fixed_abs, tag = 'smem constant byte address 0x4 - core index']
  #allocation1 [shape = 'u32[72,128]{1,0:T(1,128)}', space=vmem, size = 0x9000, scoped, tag = 'internal scratch']
  %s0 = inlined_call_operand.vmem [shape: s32[16,1], index: 0, kind: input, shape index: {}]
  %s1 = inlined_call_operand.vmem [shape: f32[16,32], index: 1, kind: input, shape index: {}]
  %s2 = inlined_call_operand.hbm [shape: f32[32,32], index: 2, kind: input, shape index: {}]
  %s3 = inlined_call_operand.vmem [shape: f32[16,1], index: 3, kind: output, shape index: {}]
  %s4 = sld [smem:[#allocation0]]
  $region49: #{tpu_custom_call.1} parent=0
    _
  %s6 = ssub.s32 1, %s4
  %s7 = scalar_select 0, %s6, %s4
  $region1: #{tpu_custom_call.1} parent=0
    #allocation2 [shape = 'u8[16384]{0}', space=vmem, size = 0x4000, scoped, tag = 'input window, operand 2, single buffered']
    #allocation3 [shape = 's32[2]{0}', space=sflag, size = 0x8, scoped, tag = 'scoped memory for tpu_custom_call.1']
    %8 = vsyncpa [#allocation3], 0
    loop: start=0, step=1, limit=4
    $region2: #{tpu_custom_call.1} parent=1 // loop_pre_header
      _
    $region3: #{tpu_custom_call.1} parent=1 // loop_header
      %s10 = sphi 0, %s14
      %p11 = scmp.ge.s32.totalorder %s10, 4
      %s20 = sphi 0, %s22
      %s23 = sphi 0, %s20
      %s24 = sphi 0, %s23
      %s40 = sphi 0, %s24
      %s46 = sphi 0, %s48
      %s49 = sphi 0, %s46
      %s50 = sphi 0, %s49
      %s66 = sphi 0, %s50
      %s70 = sphi 0, %s70
      %s72 = sphi 0, %s70
      %s73 = sphi 0, %s72
      %s87 = sphi 0, %s73
      %s93 = sphi 0, %s95
      %s96 = sphi 0, %s93
      %s97 = sphi 0, %s96
      %s113 = sphi 0, %s97
    $region4: #{tpu_custom_call.1} parent=1 // loop_header_branch
      %13 = sbr.rel (%p11) target = $region8
    $region5: #{tpu_custom_call.1} parent=1 // loop_body
      %s15 = ssub.s32 %s10, 1
      %s16 = ssub.s32 %s10, 2
      %s17 = sadd.s32 %s10, 1
      %s18 = ssub.s32 %s10, %s17
      %p19 = scmp.eq.s32.totalorder %s18, 0
      %s21 = sadd.s32 %s20, 1
      %s22 = scalar_select %p19, %s20, %s21
      %p25 = pneg %p19
      %p26 = scmp.eq.s32.totalorder %s10, 1
      %p27 = por %p25, %p26
      %p28 = scmp.ne.s32.totalorder %s20, %s23
      %p29 = scmp.eq.s32.totalorder %s10, 0
      %p30 = por %p28, %p29
      %p31 = scmp.ne.s32.totalorder %s20, %s23
      %p32 = scmp.eq.s32.totalorder %s15, 1
      %p33 = por %p31, %p32
      %p34 = scmp.ne.s32.totalorder %s23, %s24
      %p35 = scmp.eq.s32.totalorder %s15, 0
      %p36 = por %p34, %p35
      %p37 = scmp.ne.s32.totalorder %s23, %s24
      %p38 = scmp.eq.s32.totalorder %s16, 1
      %p39 = por %p37, %p38
      %p41 = scmp.ne.s32.totalorder %s24, %s40
      %p42 = scmp.eq.s32.totalorder %s16, 0
      %p43 = por %p41, %p42
      %s44 = ssub.s32 %s10, %s17
      %p45 = scmp.eq.s32.totalorder %s44, 0
      %s47 = sadd.s32 %s46, 1
      %s48 = scalar_select %p45, %s46, %s47
      %p51 = pneg %p45
      %p52 = scmp.eq.s32.totalorder %s10, 1
      %p53 = por %p51, %p52
      %p54 = scmp.ne.s32.totalorder %s46, %s49
      %p55 = scmp.eq.s32.totalorder %s10, 0
      %p56 = por %p54, %p55
      %p57 = scmp.ne.s32.totalorder %s46, %s49
      %p58 = scmp.eq.s32.totalorder %s15, 1
      %p59 = por %p57, %p58
      %p60 = scmp.ne.s32.totalorder %s49, %s50
      %p61 = scmp.eq.s32.totalorder %s15, 0
      %p62 = por %p60, %p61
      %p63 = scmp.ne.s32.totalorder %s49, %s50
      %p64 = scmp.eq.s32.totalorder %s16, 1
      %p65 = por %p63, %p64
      %p67 = scmp.ne.s32.totalorder %s50, %s66
      %p68 = scmp.eq.s32.totalorder %s16, 0
      %p69 = por %p67, %p68
      %s71 = sadd.s32 %s70, 1
      %p74 = scmp.eq.s32.totalorder %s10, 1
      %p75 = scmp.ne.s32.totalorder %s70, %s72
      %p76 = scmp.eq.s32.totalorder %s10, 0
      %p77 = por %p75, %p76
      %p78 = scmp.ne.s32.totalorder %s70, %s72
      %p79 = scmp.eq.s32.totalorder %s15, 1
      %p80 = por %p78, %p79
      %p81 = scmp.ne.s32.totalorder %s72, %s73
      %p82 = scmp.eq.s32.totalorder %s15, 0
      %p83 = por %p81, %p82
      %p84 = scmp.ne.s32.totalorder %s72, %s73
      %p85 = scmp.eq.s32.totalorder %s16, 1
      %p86 = por %p84, %p85
      %p88 = scmp.ne.s32.totalorder %s73, %s87
      %p89 = scmp.eq.s32.totalorder %s16, 0
      %p90 = por %p88, %p89
      %s91 = ssub.s32 %s10, %s17
      %p92 = scmp.eq.s32.totalorder %s91, 0
      %s94 = sadd.s32 %s93, 1
      %s95 = scalar_select %p92, %s93, %s94
      %p98 = pneg %p92
      %p99 = scmp.eq.s32.totalorder %s10, 1
      %p100 = por %p98, %p99
      %p101 = scmp.ne.s32.totalorder %s93, %s96
      %p102 = scmp.eq.s32.totalorder %s10, 0
      %p103 = por %p101, %p102
      %p104 = scmp.ne.s32.totalorder %s93, %s96
      %p105 = scmp.eq.s32.totalorder %s15, 1
      %p106 = por %p104, %p105
      %p107 = scmp.ne.s32.totalorder %s96, %s97
      %p108 = scmp.eq.s32.totalorder %s15, 0
      %p109 = por %p107, %p108
      %p110 = scmp.ne.s32.totalorder %s96, %s97
      %p111 = scmp.eq.s32.totalorder %s16, 1
      %p112 = por %p110, %p111
      %p114 = scmp.ne.s32.totalorder %s97, %s113
      %p115 = scmp.eq.s32.totalorder %s16, 0
      %p116 = por %p114, %p115
      %p117 = scmp.le.s32.totalorder 1, %s10
      %p118 = scmp.lt.s32.totalorder %s10, 3
      %p119 = pnand %p117, %p118
      %p120 = pneg %p119
      // Predicated region
      $region9: #{tpu_custom_call.1} parent=5 // pred_check
        _
      $region10: #{tpu_custom_call.1} parent=5 // pred_check_branch
        %122 = sbr.rel (%p119) target = $region12
      $region11: #{tpu_custom_call.1} parent=5 // pred_region
        %s123 = ssub.s32 %s10, 1
        // Predicated region
        $region13: #{tpu_custom_call.1} parent=11 // pred_check
          %p124 = pneg %p83
        $region14: #{tpu_custom_call.1} parent=11 // pred_check_branch
          %126 = sbr.rel (%p124) target = $region16
        $region15: #{tpu_custom_call.1} parent=11 // pred_region
          %128 = vsyncadd [#allocation3], 0
          %s129 = sshll.u32 %s2, 4
          %s130 = int_to_ptr.hbm [resolvable:$true] %s129
          %s131 = sshll.u32 [#allocation2], 4
          %s132 = int_to_ptr.vmem [resolvable:$true] %s131
          %137 = dma.hbm_to_vmem [thread:$0]  %s130, 512, %s132, [#allocation3], 128, 128, 8
        $region16: #{tpu_custom_call.1} parent=11 // pred_fallthru
          _
      $region12: #{tpu_custom_call.1} parent=5 // pred_fallthru
        _
      %p138 = scmp.lt.s32.totalorder %s10, 2
      // Predicated region
      $region17: #{tpu_custom_call.1} parent=5 // pred_check
        %p139 = pneg %p138
      $region18: #{tpu_custom_call.1} parent=5 // pred_check_branch
        %141 = sbr.rel (%p139) target = $region20
      $region19: #{tpu_custom_call.1} parent=5 // pred_region
        // Predicated region
        $region21: #{tpu_custom_call.1} parent=19 // pred_check
          %p142 = pneg %p30
        $region22: #{tpu_custom_call.1} parent=19 // pred_check_branch
          %144 = sbr.rel (%p142) target = $region24
        $region23: #{tpu_custom_call.1} parent=19 // pred_region
          %p145 = scmp.lt.s32.totalorder %s10, 1
          %s146 = scalar_select %p145, %s10, 1
          %s147 = smul.addr %s146, 8
          %s148 = scalar_lea.vmem %s0, %s147
        $region24: #{tpu_custom_call.1} parent=19 // pred_fallthru
          _
        // Predicated region
        $region25: #{tpu_custom_call.1} parent=19 // pred_check
          %p149 = pneg %p56
        $region26: #{tpu_custom_call.1} parent=19 // pred_check_branch
          %151 = sbr.rel (%p149) target = $region28
        $region27: #{tpu_custom_call.1} parent=19 // pred_region
          %p152 = scmp.lt.s32.totalorder %s10, 1
          %s153 = scalar_select %p152, %s10, 1
          %s154 = smul.addr %s153, 8
          %s155 = scalar_lea.vmem %s1, %s154
        $region28: #{tpu_custom_call.1} parent=19 // pred_fallthru
          _
      $region20: #{tpu_custom_call.1} parent=5 // pred_fallthru
        _
      %p156 = scmp.le.s32.totalorder 1, %s10
      %p157 = scmp.lt.s32.totalorder %s10, 3
      %p158 = pnand %p156, %p157
      %p159 = pneg %p158
      // Predicated region
      $region29: #{tpu_custom_call.1} parent=5 // pred_check
        _
      $region30: #{tpu_custom_call.1} parent=5 // pred_check_branch
        %161 = sbr.rel (%p158) target = $region32
      $region31: #{tpu_custom_call.1} parent=5 // pred_region
        %s162 = ssub.s32 %s10, 1
        // Predicated region
        $region33: #{tpu_custom_call.1} parent=31 // pred_check
          %p163 = pneg %p83
        $region34: #{tpu_custom_call.1} parent=31 // pred_check_branch
          %165 = sbr.rel (%p163) target = $region36
        $region35: #{tpu_custom_call.1} parent=31 // pred_region
          %167 = dma.done [#allocation3], 512
        $region36: #{tpu_custom_call.1} parent=31 // pred_fallthru
          _
        %p168 = scmp.lt.s32.totalorder %s15, 1
        %s169 = scalar_select %p168, %s15, 1
        %s170 = smul.addr %s169, 8
        %s171 = scalar_lea.vmem %s0, %s170
        %p172 = pneg %p36
        %p173 = pneg %p33
        %p174 = scmp.lt.s32.totalorder %s15, 1
        %s175 = scalar_select %p174, %s15, 1
        %s176 = smul.addr %s175, 8
        %s177 = scalar_lea.vmem %s1, %s176
        %p178 = pneg %p62
        %p179 = pneg %p59
        %p180 = pneg %p83
        %p181 = pneg %p80
        %p182 = pneg %p109
        %p183 = pneg %p106
        %p184 = scmp.lt.s32.totalorder %s15, 1
        %s185 = scalar_select %p184, %s15, 1
        %s186 = smul.addr %s185, 8
        %s187 = scalar_lea.vmem %s3, %s186
        %p188 = scmp.lt.s32.totalorder %s15, 1
        %s189 = scalar_select %p188, %s15, 1
        %s190 = smul.addr %s189, 8
        %s191 = scalar_lea.vmem %s0, %s190
        %p192 = scmp.lt.s32.totalorder %s15, 1
        %s193 = scalar_select %p192, %s15, 1
        %s194 = smul.addr %s193, 8
        %s195 = scalar_lea.vmem %s1, %s194
        %p196 = scmp.lt.s32.totalorder %s15, 1
        %s197 = scalar_select %p196, %s15, 1
        %s198 = smul.addr %s197, 8
        %s199 = scalar_lea.vmem %s3, %s198
        %v200 = vld [vmem:[%s195] sm:$0xff]
        %v201 = vld [vmem:[#allocation2] sm:$0xff]
        %v202 = vld [vmem:[#allocation2 + $0x8] sm:$0xff]
        %v203 = vld [vmem:[#allocation2 + $0x10] sm:$0xff]
        %v204 = vld [vmem:[#allocation2 + $0x18] sm:$0xff]
        %v205 = vld [vmem:[%s191] sm:$0xff]
        %v206 = vlaneseq
        %v207 = vand.u32 %v206, 127
        %208 = vset.pattern.permute.xlu0 0
        %209 = vperm.xlu0 %208, %v205
        %v210 = vpop.permute.xlu0 %209
        %vm211 = vcmp.eq.s32.totalorder %v207, %v210
        %v212 = vsel %vm211, 1, 0
        %v213 = vcvt.s32.f32 %v212
        %vm214 = vcmask 261120
        %v216 = vsel %vm214, %v213, 0
        %218 = vmatpush.msra.mxu0 0.0
        %219 = vmatpush.msra.mxu0 0.0
        %220 = vmatpush.msra.mxu0 0.0
        %221 = vmatpush.msra.mxu0 0.0
        %222 = vmatpush.msra.mxu0 0.0
        %223 = vmatpush.msra.mxu0 0.0
        %224 = vmatpush.msra.mxu0 0.0
        %225 = vmatpush.msra.mxu0 0.0
        %226 = vmatpush.msra.mxu0 0.0
        %227 = vmatpush.msra.mxu0 0.0
        %228 = vmatpush.msra.mxu0 0.0
        %229 = vmatpush.msra.mxu0 0.0
        %230 = vmatpush.msra.mxu0 %v204
        %231 = vmatpush.msra.mxu0 %v203
        %232 = vmatpush.msra.mxu0 %v202
        %233 = vmatpush.msra.mxu0 %v201
        %234 = vmatmul.f32.gmra.mxu0 %v216
        %v235 = vpop.f32.mrf.mxu0
        %v236 = vadd.f32 0.0, %v235
        %237 = vdwg.mxu0
        %v238 = vsel %vm214, %v200, -inf
        %239 = vmax.xlane.f32.xlu0 %v238
        %v240 = vpop.xlane.xlu0 %239
        %v241 = vsub.f32 %v200, %v240
        %v242 = vmul.f32 %v241, 1.442695
        %v243 = vpow.pop %v242
        %v244 = vsel %vm214, %v243, 0.0
        %245 = vadd.xlane.f32.xlu0 %v244
        %v246 = vpop.xlane.xlu0 %245
        %v247 = vlog2.pop %v246
        %v248 = vmul.f32 %v247, 0.6931472
        %v249 = vsel %vm214, %v236, 0.0
        %250 = vadd.xlane.f32.xlu0 %v249
        %v251 = vpop.xlane.xlu0 %250
        %v252 = vmul.f32 %v236, %v200
        %v253 = vsel %vm214, %v252, 0.0
        %254 = vadd.xlane.f32.xlu0 %v253
        %v255 = vpop.xlane.xlu0 %254
        %v256 = vadd.f32 %v240, %v248
        %v257 = vmul.f32 %v256, %v251
        %v258 = vsub.f32 %v257, %v255
        %v259 = vlaneseq
        %v260 = vshrl.u32 %v259, 7
        %s261 = smul.u32 %s15, 8
        %v262 = vstv %s261
        %v263 = vadd.s32 %v260, %v262
        %vm264 = vcmp.lt.s32.totalorder %v263, 16
        %v265 = vsel %vm264, %v258, 0.0
        %vm266 = vcmask 7168
        %267 = vst.msk [vmem:[%s199] sm:$0xff] %vm266, %v265
        %p268 = scmp.lt.s32.totalorder %s15, 1
        %s269 = scalar_select %p268, %s15, 1
        %s270 = smul.addr %s269, 8
        %s271 = scalar_lea.vmem %s3, %s270
        // Predicated region
        $region37: #{tpu_custom_call.1} parent=31 // pred_check
          %p272 = pneg %p106
        $region38: #{tpu_custom_call.1} parent=31 // pred_check_branch
          %274 = sbr.rel (%p272) target = $region40
        $region39: #{tpu_custom_call.1} parent=31 // pred_region
          _
        $region40: #{tpu_custom_call.1} parent=31 // pred_fallthru
          _
      $region32: #{tpu_custom_call.1} parent=5 // pred_fallthru
        _
      %p275 = scmp.le.s32.totalorder 2, %s10
      // Predicated region
      $region41: #{tpu_custom_call.1} parent=5 // pred_check
        %p276 = pneg %p275
      $region42: #{tpu_custom_call.1} parent=5 // pred_check_branch
        %278 = sbr.rel (%p276) target = $region44
      $region43: #{tpu_custom_call.1} parent=5 // pred_region
        %s279 = ssub.s32 %s10, 2
        // Predicated region
        $region45: #{tpu_custom_call.1} parent=43 // pred_check
          %p280 = pneg %p112
        $region46: #{tpu_custom_call.1} parent=43 // pred_check_branch
          %282 = sbr.rel (%p280) target = $region48
        $region47: #{tpu_custom_call.1} parent=43 // pred_region
          %p283 = scmp.lt.s32.totalorder %s16, 1
          %s284 = scalar_select %p283, %s16, 1
          %s285 = smul.addr %s284, 8
          %s286 = scalar_lea.vmem %s3, %s285
        $region48: #{tpu_custom_call.1} parent=43 // pred_fallthru
          _
      $region44: #{tpu_custom_call.1} parent=5 // pred_fallthru
        _
    $region6: #{tpu_custom_call.1} parent=1 // loop_footer
      %s14 = sadd.s32 1, %s10
    $region7: #{tpu_custom_call.1} parent=1 // loop_footer_branch
      %9 = sbr.rel target = $region3
    $region8: #{tpu_custom_call.1} parent=1 // loop_exit
      _
    %287 = vsyncpa [#allocation3], 1
    %s288 = scalar_lea.sflag [#allocation3], 1
    %289 = vsyncpa %s288, 1

</llo_original>
